<compile_context>
chip_gen: v7x
topology: tpu7x:2x2x1
jax: 0.10.0
libtpu: 0.0.40
codegen_flags: <defaults>
</compile_context>

<pallas_src>
import functools

import jax
import jax.numpy as jnp
from jax.experimental import pallas as pl
from jax.experimental.pallas import tpu as pltpu

THRE = 0.3

_MATMUL_MAX_N = 512            # triangular-matmul path up to this sequence length
_VMEM_LIMIT_BYTES = 32 << 20   # safe on v5e/v6e (128 MiB phys) and v7x (64 MiB phys)
_FOOTPRINT_TARGET = 16 << 20   # target for 2x in + 2x out blocks + f32 temporaries


def _build_transfer_matrix(n, w):
    """Lower-triangular T with out = T @ x along the N axis (f32)."""
    w = float(w)
    i = jnp.arange(n)[:, None]
    j = jnp.arange(n)[None, :]
    decay = jnp.power(jnp.float32(1.0 - w),
                      jnp.maximum(i - j, 0).astype(jnp.float32))
    t = jnp.where(j == 0, decay, jnp.float32(w) * decay)
    t = jnp.where(j <= i, t, jnp.float32(0.0))
    return t.astype(jnp.float32)


def _matmul_kernel(t_ref, x_ref, o_ref):
    # t_ref: (N, N) f32;  x_ref / o_ref: (tm, N, tl) blocks.
    x = x_ref[...].astype(jnp.float32)                      # (tm, N, tl)
    t = t_ref[...]                                          # (N, N) f32
    tm = x.shape[0]
    tb = jnp.broadcast_to(t[None], (tm, t.shape[0], t.shape[1]))  # (tm, N, N)
    # Batched MXU contraction over the N (time) axis, f32 accumulation.
    out = jax.lax.dot_general(
        tb, x,
        dimension_numbers=(((2,), (1,)), ((0,), (0,))),
        preferred_element_type=jnp.float32)                 # (tm, N, tl)
    o_ref[...] = out.astype(o_ref.dtype)


def _loop_kernel(x_ref, o_ref, *, w, n):
    # Fallback for very large N: sequential recursion, carry in f32 vregs.
    w = float(w)
    prev0 = x_ref[:, 0, :].astype(jnp.float32)
    o_ref[:, 0, :] = prev0.astype(o_ref.dtype)

    def body(i, prev):
        xi = x_ref[:, pl.ds(i, 1), :][:, 0, :].astype(jnp.float32)
        cur = w * xi + (1.0 - w) * prev
        o_ref[:, pl.ds(i, 1), :] = cur[:, None, :].astype(o_ref.dtype)
        return cur

    jax.lax.fori_loop(1, n, body, prev0, unroll=8)


def _choose_tiling(M, N, L, itemsize):
    """Pick (tm, tl) so the pipelined VMEM footprint stays under the target."""
    # Per-element footprint: double-buffered input + output blocks (input dtype)
    # plus ~two f32 compute temporaries in the matmul kernel.
    per_elem = 4 * itemsize + 8
    max_block_elems = max(1, _FOOTPRINT_TARGET // per_elem)

    # Lane tile over L: use full L when it fits, else a multiple of 128.
    if N * L <= max_block_elems or L <= 128:
        tl = L
    else:
        tl = (max_block_elems // (N * 128)) * 128
        tl = min(max(128, tl), L)
        # TODO(synk): for extremely large N even a (1, N, 128) block may exceed
        # VMEM; such shapes would additionally need tiling over N.
    max_tm = max(1, max_block_elems // (N * tl))
    tm = min(M, max_tm)

    # Prefer >= 2 grid blocks so v7x's second TensorCore gets work; on single-TC
    # v5e/v6e this costs only one extra ~0.35 us grid step.
    if pl.cdiv(M, tm) * pl.cdiv(L, tl) < 2 and M > 1:
        tm = pl.cdiv(M, 2)
    return tm, tl


def recursive_filter(x, w=THRE):
    """x: (B, C, N, H, W) -> same shape, EMA along axis 2."""
    B, C, N, H, W = x.shape
    M, L = B * C, H * W

    # Free reshape (merges adjacent dims only).
    x2 = x.reshape(M, N, L)
    itemsize = x2.dtype.itemsize

    tm, tl = _choose_tiling(M, N, L, itemsize)
    grid = (pl.cdiv(M, tm), pl.cdiv(L, tl))

    x_spec = pl.BlockSpec((tm, N, tl), lambda i, j: (i, 0, j))
    out_spec = pl.BlockSpec((tm, N, tl), lambda i, j: (i, 0, j))

    if N <= _MATMUL_MAX_N:
        t = _build_transfer_matrix(N, w)
        kernel = _matmul_kernel
        in_specs = [pl.BlockSpec((N, N), lambda i, j: (0, 0)), x_spec]
        operands = (t, x2)
        flops = 2 * M * N * N * L
    else:
        kernel = functools.partial(_loop_kernel, w=float(w), n=N)
        in_specs = [x_spec]
        operands = (x2,)
        flops = 3 * M * N * L

    out2 = pl.pallas_call(
        kernel,
        out_shape=jax.ShapeDtypeStruct((M, N, L), x2.dtype),
        grid_spec=pltpu.PrefetchScalarGridSpec(
            num_scalar_prefetch=0,
            grid=grid,
            in_specs=in_specs,
            out_specs=out_spec,
        ),
        compiler_params=pltpu.CompilerParams(
            dimension_semantics=("parallel", "parallel"),
            vmem_limit_bytes=_VMEM_LIMIT_BYTES,
        ),
        cost_estimate=pl.CostEstimate(
            flops=int(flops),
            transcendentals=0,
            bytes_accessed=int(2 * M * N * L * itemsize),
        ),
    )(*operands)

    # Free reshape back.
    return out2.reshape(B, C, N, H, W)


def _reference(x, w=THRE):
    """Pure-JAX reference matching the PyTorch loop."""
    def step(prev, xi):
        cur = w * xi + (1 - w) * prev
        return cur, cur
    x_n_first = jnp.moveaxis(x, 2, 0)          # (N, B, C, H, W)
    first = x_n_first[0]
    _, rest = jax.lax.scan(step, first, x_n_first[1:])
    out = jnp.concatenate([first[None], rest], axis=0)
    return jnp.moveaxis(out, 0, 2)


if __name__ == "__main__":
    key = jax.random.PRNGKey(0)
    B, C, N, H, W = 2, 4, 8, 16, 16
    x = jax.random.normal(key, (B, C, N, H, W), dtype=jnp.float32)

    out = jax.block_until_ready(recursive_filter(x, THRE))

    ref = _reference(x, THRE)
    assert out.shape == x.shape and out.dtype == x.dtype
    assert jnp.allclose(out, ref, atol=1e-5, rtol=1e-5)

    print("KERNEL_OK")
</pallas_src>

<mosaic_0001>
module attributes {stable_mosaic.version = 11 : i64} {
  func.func @_matmul_kernel(%arg0: i32, %arg1: i32, %arg2: memref<8x8xf32, #tpu.memory_space<vmem>>, %arg3: memref<4x8x256xf32, #tpu.memory_space<vmem>>, %arg4: memref<4x8x256xf32, #tpu.memory_space<vmem>>) attributes {dimension_semantics = [#tpu.dimension_semantics<parallel>, #tpu.dimension_semantics<parallel>], iteration_bounds = array<i64: 2, 1>, scalar_prefetch = 0 : i64, scratch_operands = 0 : i64, tpu.core_type = #tpu.core_type<tc>, window_params = [{pipeline_mode = #tpu.pipeline_mode<synchronous>, transform_indices = @transform_0, window_bounds = array<i64: 8, 8>}, {transform_indices = @transform_1, window_bounds = array<i64: 4, 8, 256>}, {transform_indices = @transform_2, window_bounds = array<i64: 4, 8, 256>}]} {
    %c0 = arith.constant 0 : index
    %c0_0 = arith.constant 0 : index
    %c0_1 = arith.constant 0 : index
    %0 = vector.load %arg3[%c0, %c0_0, %c0_1] : memref<4x8x256xf32, #tpu.memory_space<vmem>>, vector<4x8x256xf32>
    %c0_2 = arith.constant 0 : index
    %c0_3 = arith.constant 0 : index
    %1 = vector.load %arg2[%c0_2, %c0_3] : memref<8x8xf32, #tpu.memory_space<vmem>>, vector<8x8xf32>
    %2 = vector.shape_cast %1 : vector<8x8xf32> to vector<1x8x8xf32>
    %3 = vector.shape_cast %2 : vector<1x8x8xf32> to vector<1x8x8xf32>
    %4 = vector.broadcast %3 : vector<1x8x8xf32> to vector<4x8x8xf32>
    %cst = arith.constant dense<0.000000e+00> : vector<4x8x256xf32>
    %5 = tpu.matmul %4, %0, %cst {dimension_numbers = #tpu.dot_dimension_numbers<[2], [1], [1], [2], [0, 0, 0, 1, 1, 2], [0], [0]>} : vector<4x8x8xf32>, vector<4x8x256xf32>, vector<4x8x256xf32> -> vector<4x8x256xf32>
    %c0_4 = arith.constant 0 : index
    %c0_5 = arith.constant 0 : index
    %c0_6 = arith.constant 0 : index
    %6 = vector.load %arg4[%c0_4, %c0_5, %c0_6] : memref<4x8x256xf32, #tpu.memory_space<vmem>>, vector<4x8x256xf32>
    tpu.vector_store %arg4[%c0_4, %c0_5, %c0_6], %5 {strides = array<i32>} : memref<4x8x256xf32, #tpu.memory_space<vmem>>, vector<4x8x256xf32>,
    return
  }
  func.func @transform_0(%arg0: i32, %arg1: i32) -> (i32, i32) {
    %c0_i32 = arith.constant 0 : i32
    %c0_i32_0 = arith.constant 0 : i32
    %c0_i32_1 = arith.constant 0 : i32
    return %c0_i32, %c0_i32_0 : i32, i32
  }
  func.func @transform_1(%arg0: i32, %arg1: i32) -> (i32, i32, i32) {
    %c0_i32 = arith.constant 0 : i32
    %c0_i32_0 = arith.constant 0 : i32
    return %arg0, %c0_i32, %arg1 : i32, i32, i32
  }
  func.func @transform_2(%arg0: i32, %arg1: i32) -> (i32, i32, i32) {
    %c0_i32 = arith.constant 0 : i32
    %c0_i32_0 = arith.constant 0 : i32
    return %arg0, %c0_i32, %arg1 : i32, i32, i32
  }
}

</mosaic_0001>

<llo_original>
// kernel: tpu_custom_call.1
$region0: #{tpu_custom_call.1}
  #allocation0 [shape = 'u32[]', space=smem, size = 0x4, offset = 0x4, fixed_abs, tag = 'smem constant byte address 0x4 - core index']
  #allocation1 [shape = 'u32[144,128]{1,0:T(1,128)}', space=vmem, size = 0x12000, scoped, tag = 'internal scratch']
  %s0 = inlined_call_operand.hbm [shape: f32[8,8], index: 0, kind: input, shape index: {}]
  %s1 = inlined_call_operand.hbm [shape: f32[8,8,256], index: 1, kind: input, shape index: {}]
  %s2 = inlined_call_operand.hbm [shape: f32[8,8,256], index: 2, kind: output, shape index: {}]
  %s3 = sld [smem:[#allocation0]]
  $region49: #{tpu_custom_call.1} parent=0
    _
  %s5 = ssub.s32 1, %s3
  %s6 = scalar_select 0, %s5, %s3
  $region1: #{tpu_custom_call.1} parent=0
    #allocation2 [shape = 'u8[4096]{0}', space=vmem, size = 0x1000, scoped, tag = 'input window, operand 0, single buffered']
    #allocation3 [shape = 's32[2]{0}', space=sflag, size = 0x8, scoped, tag = 'scoped memory for tpu_custom_call.1']
    #allocation4 [shape = 's32[2]{0}', space=sflag, size = 0x8, scoped, tag = 'scoped memory for tpu_custom_call.1']
    #allocation5 [shape = 'u8[65536]{0}', space=vmem, size = 0x10000, scoped, tag = 'input window, operand 1']
    #allocation6 [shape = 's32[2]{0}', space=sflag, size = 0x8, scoped, tag = 'scoped memory for tpu_custom_call.1']
    #allocation7 [shape = 'u8[65536]{0}', space=vmem, size = 0x10000, scoped, tag = 'output window, operand 0']
    %7 = vsyncpa [#allocation3], 0
    %8 = vsyncpa [#allocation6], 0
    %s9 = scalar_lea.sflag [#allocation6], 1
    %10 = vsyncpa %s9, 0
    %11 = vsyncpa [#allocation4], 0
    %s12 = scalar_lea.sflag [#allocation4], 1
    %13 = vsyncpa %s12, 0
    loop: start=0, step=1, limit=4
    $region2: #{tpu_custom_call.1} parent=1 // loop_pre_header
      _
    $region3: #{tpu_custom_call.1} parent=1 // loop_header
      %s15 = sphi 0, %s19
      %p16 = scmp.ge.s32.totalorder %s15, 4
      %s22 = sphi 0, %s34
      %s23 = sphi 0, %s30
      %s24 = sphi 0, %s22
      %s25 = sphi 0, %s23
      %s26 = sphi 0, %s24
      %s27 = sphi 0, %s25
      %s35 = sphi 0, %s35
      %s37 = sphi 0, %s35
      %s38 = sphi 0, %s37
      %s52 = sphi 0, %s38
      %s60 = sphi 0, %s62
      %s63 = sphi 0, %s60
      %s64 = sphi 0, %s63
      %s80 = sphi 0, %s64
      %s88 = sphi 0, %s90
      %s91 = sphi 0, %s88
      %s92 = sphi 0, %s91
      %s108 = sphi 0, %s92
    $region4: #{tpu_custom_call.1} parent=1 // loop_header_branch
      %18 = sbr.rel (%p16) target = $region8
    $region5: #{tpu_custom_call.1} parent=1 // loop_body
      %s20 = ssub.s32 %s15, 1
      %s21 = ssub.s32 %s15, 2
      %s28 = sadd.s32 1, %s23
      %p29 = scmp.ge.s32.totalorder %s28, 1
      %s30 = scalar_select %p29, 0, %s28
      %s31 = sadd.s32 1, %s22
      %s32 = scalar_select %p29, %s31, %s22
      %p33 = scmp.ge.s32.totalorder %s32, 2
      %s34 = scalar_select %p33, 0, %s32
      %s36 = sadd.s32 %s35, 1
      %p39 = scmp.eq.s32.totalorder %s15, 1
      %p40 = scmp.ne.s32.totalorder %s35, %s37
      %p41 = scmp.eq.s32.totalorder %s15, 0
      %p42 = por %p40, %p41
      %p43 = scmp.ne.s32.totalorder %s35, %s37
      %p44 = scmp.eq.s32.totalorder %s20, 1
      %p45 = por %p43, %p44
      %p46 = scmp.ne.s32.totalorder %s37, %s38
      %p47 = scmp.eq.s32.totalorder %s20, 0
      %p48 = por %p46, %p47
      %p49 = scmp.ne.s32.totalorder %s37, %s38
      %p50 = scmp.eq.s32.totalorder %s21, 1
      %p51 = por %p49, %p50
      %p53 = scmp.ne.s32.totalorder %s38, %s52
      %p54 = scmp.eq.s32.totalorder %s21, 0
      %p55 = por %p53, %p54
      %s56 = ssub.s32 %s22, %s34
      %s57 = ssub.s32 %s23, %s30
      %s58 = sor.u32 %s56, %s57
      %p59 = scmp.eq.s32.totalorder %s58, 0
      %s61 = sadd.s32 %s60, 1
      %s62 = scalar_select %p59, %s60, %s61
      %p65 = pneg %p59
      %p66 = scmp.eq.s32.totalorder %s15, 1
      %p67 = por %p65, %p66
      %p68 = scmp.ne.s32.totalorder %s60, %s63
      %p69 = scmp.eq.s32.totalorder %s15, 0
      %p70 = por %p68, %p69
      %p71 = scmp.ne.s32.totalorder %s60, %s63
      %p72 = scmp.eq.s32.totalorder %s20, 1
      %p73 = por %p71, %p72
      %p74 = scmp.ne.s32.totalorder %s63, %s64
      %p75 = scmp.eq.s32.totalorder %s20, 0
      %p76 = por %p74, %p75
      %p77 = scmp.ne.s32.totalorder %s63, %s64
      %p78 = scmp.eq.s32.totalorder %s21, 1
      %p79 = por %p77, %p78
      %p81 = scmp.ne.s32.totalorder %s64, %s80
      %p82 = scmp.eq.s32.totalorder %s21, 0
      %p83 = por %p81, %p82
      %s84 = ssub.s32 %s22, %s34
      %s85 = ssub.s32 %s23, %s30
      %s86 = sor.u32 %s84, %s85
      %p87 = scmp.eq.s32.totalorder %s86, 0
      %s89 = sadd.s32 %s88, 1
      %s90 = scalar_select %p87, %s88, %s89
      %p93 = pneg %p87
      %p94 = scmp.eq.s32.totalorder %s15, 1
      %p95 = por %p93, %p94
      %p96 = scmp.ne.s32.totalorder %s88, %s91
      %p97 = scmp.eq.s32.totalorder %s15, 0
      %p98 = por %p96, %p97
      %p99 = scmp.ne.s32.totalorder %s88, %s91
      %p100 = scmp.eq.s32.totalorder %s20, 1
      %p101 = por %p99, %p100
      %p102 = scmp.ne.s32.totalorder %s91, %s92
      %p103 = scmp.eq.s32.totalorder %s20, 0
      %p104 = por %p102, %p103
      %p105 = scmp.ne.s32.totalorder %s91, %s92
      %p106 = scmp.eq.s32.totalorder %s21, 1
      %p107 = por %p105, %p106
      %p109 = scmp.ne.s32.totalorder %s92, %s108
      %p110 = scmp.eq.s32.totalorder %s21, 0
      %p111 = por %p109, %p110
      %p112 = scmp.le.s32.totalorder 1, %s15
      %p113 = scmp.lt.s32.totalorder %s15, 3
      %p114 = pnand %p112, %p113
      %p115 = pneg %p114
      // Predicated region
      $region9: #{tpu_custom_call.1} parent=5 // pred_check
        _
      $region10: #{tpu_custom_call.1} parent=5 // pred_check_branch
        %117 = sbr.rel (%p114) target = $region12
      $region11: #{tpu_custom_call.1} parent=5 // pred_region
        %s118 = ssub.s32 %s15, 1
        // Predicated region
        $region13: #{tpu_custom_call.1} parent=11 // pred_check
          %p119 = pneg %p48
        $region14: #{tpu_custom_call.1} parent=11 // pred_check_branch
          %121 = sbr.rel (%p119) target = $region16
        $region15: #{tpu_custom_call.1} parent=11 // pred_region
          %s123 = ssub.s32 128, 128
          %124 = vsyncadd [#allocation3], %s123
          %s126 = sshll.u32 [#allocation2], 4
          %s127 = int_to_ptr.vmem [resolvable:$true] %s126
          %129 = dma.hbm_to_vmem [thread:$0]  %s0, 128, %s127, [#allocation3]
        $region16: #{tpu_custom_call.1} parent=11 // pred_fallthru
          _
      $region12: #{tpu_custom_call.1} parent=5 // pred_fallthru
        _
      %p130 = scmp.lt.s32.totalorder %s15, 2
      // Predicated region
      $region17: #{tpu_custom_call.1} parent=5 // pred_check
        %p131 = pneg %p130
      $region18: #{tpu_custom_call.1} parent=5 // pred_check_branch
        %133 = sbr.rel (%p131) target = $region20
      $region19: #{tpu_custom_call.1} parent=5 // pred_region
        // Predicated region
        $region21: #{tpu_custom_call.1} parent=19 // pred_check
          %p134 = pneg %p70
        $region22: #{tpu_custom_call.1} parent=19 // pred_check_branch
          %136 = sbr.rel (%p134) target = $region24
        $region23: #{tpu_custom_call.1} parent=19 // pred_region
          %s137 = sand.u32 %s60, 1
          %s138 = scalar_lea.sflag [#allocation6], %s137
          %s139 = sand.u32 %s60, 1
          %s140 = smul.addr %s139, 64
          %s141 = scalar_lea.vmem [#allocation5], %s140
          %s142 = smul.u32 4, %s22
          %s143 = smul.u32 2, %s23
          %s145 = ssub.s32 1024, 1024
          %146 = vsyncadd %s138, %s145
          %s147 = smul.addr %s142, 2
          %s148 = sadd.s32 %s143, %s147
          %s149 = smul.addr %s148, 128
          %s150 = scalar_lea.hbm %s1, %s149
          %s151 = sshll.u32 %s141, 4
          %s152 = int_to_ptr.vmem [resolvable:$true] %s151
          %157 = dma.hbm_to_vmem [thread:$0]  %s150, 1024, %s152, %s138, 256, 256, 16
        $region24: #{tpu_custom_call.1} parent=19 // pred_fallthru
          _
      $region20: #{tpu_custom_call.1} parent=5 // pred_fallthru
        _
      %p158 = scmp.le.s32.totalorder 1, %s15
      %p159 = scmp.lt.s32.totalorder %s15, 3
      %p160 = pnand %p158, %p159
      %p161 = pneg %p160
      // Predicated region
      $region25: #{tpu_custom_call.1} parent=5 // pred_check
        _
      $region26: #{tpu_custom_call.1} parent=5 // pred_check_branch
        %163 = sbr.rel (%p160) target = $region28
      $region27: #{tpu_custom_call.1} parent=5 // pred_region
        %s164 = ssub.s32 %s15, 1
        // Predicated region
        $region29: #{tpu_custom_call.1} parent=27 // pred_check
          %p165 = pneg %p48
        $region30: #{tpu_custom_call.1} parent=27 // pred_check_branch
          %167 = sbr.rel (%p165) target = $region32
        $region31: #{tpu_custom_call.1} parent=27 // pred_region
          %168 = dma.done [#allocation3], 128
        $region32: #{tpu_custom_call.1} parent=27 // pred_fallthru
          _
        %s169 = sand.u32 %s63, 1
        %s170 = scalar_lea.sflag [#allocation6], %s169
        %s171 = sand.u32 %s63, 1
        %s172 = smul.addr %s171, 64
        %s173 = scalar_lea.vmem [#allocation5], %s172
        // Predicated region
        $region33: #{tpu_custom_call.1} parent=27 // pred_check
          %p174 = pneg %p76
        $region34: #{tpu_custom_call.1} parent=27 // pred_check_branch
          %176 = sbr.rel (%p174) target = $region36
        $region35: #{tpu_custom_call.1} parent=27 // pred_region
          %177 = dma.done %s170, 1024
        $region36: #{tpu_custom_call.1} parent=27 // pred_fallthru
          _
        %p178 = pneg %p48
        %p179 = pneg %p45
        %s180 = sand.u32 %s63, 1
        %s181 = scalar_lea.sflag [#allocation6], %s180
        %s182 = sand.u32 %s63, 1
        %s183 = smul.addr %s182, 64
        %s184 = scalar_lea.vmem [#allocation5], %s183
        %p185 = pneg %p76
        %p186 = pneg %p73
        %p187 = pneg %p104
        %p188 = pneg %p101
        %s189 = sand.u32 %s91, 1
        %s190 = scalar_lea.sflag [#allocation4], %s189
        %s191 = sand.u32 %s91, 1
        %s192 = smul.addr %s191, 64
        %s193 = scalar_lea.vmem [#allocation7], %s192
        %s194 = smul.u32 4, %s24
        %s195 = smul.u32 2, %s25
        %s196 = smul.u32 4, %s24
        %s197 = smul.u32 2, %s25
        %v198 = vld [vmem:[%s173] sm:$0xff]
        %v199 = vld [vmem:[%s173 + $0x8] sm:$0xff]
        %v200 = vld [vmem:[%s173 + $0x10] sm:$0xff]
        %v201 = vld [vmem:[%s173 + $0x18] sm:$0xff]
        %v202 = vld [vmem:[%s173 + $0x20] sm:$0xff]
        %v203 = vld [vmem:[%s173 + $0x28] sm:$0xff]
        %v204 = vld [vmem:[%s173 + $0x30] sm:$0xff]
        %v205 = vld [vmem:[%s173 + $0x38] sm:$0xff]
        %v206 = vld [vmem:[#allocation2] sm:$0xff]
        %vm207 = vcmask 64512
        %v209 = vsel %vm207, %v206, 0
        %211 = vmatprep.subr.mxu0 %v199
        %212 = vmatpush1.msra.mxu0 %v198
        %213 = vmatprep.subr.mxu0 0.0
        %214 = vmatpush1.msra.mxu0 0.0
        %215 = vmatprep.subr.mxu0 0.0
        %216 = vmatpush1.msra.mxu0 0.0
        %217 = vmatprep.subr.mxu0 0.0
        %218 = vmatpush1.msra.mxu0 0.0
        %219 = vmatprep.subr.mxu0 0.0
        %220 = vmatpush1.msra.mxu0 0.0
        %221 = vmatprep.subr.mxu0 0.0
        %222 = vmatpush1.msra.mxu0 0.0
        %223 = vmatprep.subr.mxu0 0.0
        %224 = vmatpush1.msra.mxu0 0.0
        %225 = vmatprep.subr.mxu0 0.0
        %226 = vmatpush1.msra.mxu0 0.0
        %227 = vmatprep.subr.mxu0 0.0
        %228 = vmatpush1.msra.mxu0 0.0
        %229 = vmatprep.subr.mxu0 0.0
        %230 = vmatpush1.msra.mxu0 0.0
        %231 = vmatprep.subr.mxu0 0.0
        %232 = vmatpush1.msra.mxu0 0.0
        %233 = vmatprep.subr.mxu0 0.0
        %234 = vmatpush1.msra.mxu0 0.0
        %235 = vmatprep.subr.mxu0 0.0
        %236 = vmatpush1.msra.mxu0 0.0
        %237 = vmatprep.subr.mxu0 0.0
        %238 = vmatpush1.msra.mxu0 0.0
        %239 = vmatprep.subr.mxu0 0.0
        %240 = vmatpush1.msra.mxu0 0.0
        %241 = vmatprep.subr.mxu0 0.0
        %242 = vmatpush1.msra.mxu0 0.0
        %243 = vmatprep.subr.mxu0 0.0
        %244 = vmatpush1.msra.mxu0 0.0
        %245 = vmatprep.subr.mxu0 0.0
        %246 = vmatpush1.msra.mxu0 0.0
        %247 = vmatprep.subr.mxu0 0.0
        %248 = vmatpush1.msra.mxu0 0.0
        %249 = vmatprep.subr.mxu0 0.0
        %250 = vmatpush1.msra.mxu0 0.0
        %251 = vmatprep.subr.mxu0 0.0
        %252 = vmatpush1.msra.mxu0 0.0
        %253 = vmatprep.subr.mxu0 0.0
        %254 = vmatpush1.msra.mxu0 0.0
        %255 = vmatprep.subr.mxu0 0.0
        %256 = vmatpush1.msra.mxu0 0.0
        %257 = vmatprep.subr.mxu0 0.0
        %258 = vmatpush1.msra.mxu0 0.0
        %259 = vmatprep.subr.mxu0 0.0
        %260 = vmatpush1.msra.mxu0 0.0
        %261 = vmatprep.subr.mxu0 0.0
        %262 = vmatpush1.msra.mxu0 0.0
        %263 = vmatprep.subr.mxu0 0.0
        %264 = vmatpush1.msra.mxu0 0.0
        %265 = vmatprep.subr.mxu0 0.0
        %266 = vmatpush1.msra.mxu0 0.0
        %267 = vmatprep.subr.mxu0 0.0
        %268 = vmatpush1.msra.mxu0 0.0
        %269 = vmatprep.subr.mxu0 0.0
        %270 = vmatpush1.msra.mxu0 0.0
        %271 = vmatprep.subr.mxu0 0.0
        %272 = vmatpush1.msra.mxu0 0.0
        %273 = vmatprep.subr.mxu0 0.0
        %274 = vmatpush1.msra.mxu0 0.0
        %275 = vmatprep.mubr.f32.mxu0 0.0
        %276 = vmatmul.mubr.f32.gmra.mrb[0].mxu0 %v209
        %v277 = vpop.f32.mrb[0].mxu0
        %v278 = vadd.f32 0.0, %v277
        %v279 = vpop.f32.mrb[0].mxu0
        %v280 = vadd.f32 0.0, %v279
        %281 = vdwg.mxu0
        %282 = vmatprep.subr.mxu0 %v201
        %283 = vmatpush1.msra.mxu0 %v200
        %284 = vmatprep.subr.mxu0 0.0
        %285 = vmatpush1.msra.mxu0 0.0
        %286 = vmatprep.subr.mxu0 0.0
        %287 = vmatpush1.msra.mxu0 0.0
        %288 = vmatprep.subr.mxu0 0.0
        %289 = vmatpush1.msra.mxu0 0.0
        %290 = vmatprep.subr.mxu0 0.0
        %291 = vmatpush1.msra.mxu0 0.0
        %292 = vmatprep.subr.mxu0 0.0
        %293 = vmatpush1.msra.mxu0 0.0
        %294 = vmatprep.subr.mxu0 0.0
        %295 = vmatpush1.msra.mxu0 0.0
        %296 = vmatprep.subr.mxu0 0.0
        %297 = vmatpush1.msra.mxu0 0.0
        %298 = vmatprep.subr.mxu0 0.0
        %299 = vmatpush1.msra.mxu0 0.0
        %300 = vmatprep.subr.mxu0 0.0
        %301 = vmatpush1.msra.mxu0 0.0
        %302 = vmatprep.subr.mxu0 0.0
        %303 = vmatpush1.msra.mxu0 0.0
        %304 = vmatprep.subr.mxu0 0.0
        %305 = vmatpush1.msra.mxu0 0.0
        %306 = vmatprep.subr.mxu0 0.0
        %307 = vmatpush1.msra.mxu0 0.0
        %308 = vmatprep.subr.mxu0 0.0
        %309 = vmatpush1.msra.mxu0 0.0
        %310 = vmatprep.subr.mxu0 0.0
        %311 = vmatpush1.msra.mxu0 0.0
        %312 = vmatprep.subr.mxu0 0.0
        %313 = vmatpush1.msra.mxu0 0.0
        %314 = vmatprep.subr.mxu0 0.0
        %315 = vmatpush1.msra.mxu0 0.0
        %316 = vmatprep.subr.mxu0 0.0
        %317 = vmatpush1.msra.mxu0 0.0
        %318 = vmatprep.subr.mxu0 0.0
        %319 = vmatpush1.msra.mxu0 0.0
        %320 = vmatprep.subr.mxu0 0.0
        %321 = vmatpush1.msra.mxu0 0.0
        %322 = vmatprep.subr.mxu0 0.0
        %323 = vmatpush1.msra.mxu0 0.0
        %324 = vmatprep.subr.mxu0 0.0
        %325 = vmatpush1.msra.mxu0 0.0
        %326 = vmatprep.subr.mxu0 0.0
        %327 = vmatpush1.msra.mxu0 0.0
        %328 = vmatprep.subr.mxu0 0.0
        %329 = vmatpush1.msra.mxu0 0.0
        %330 = vmatprep.subr.mxu0 0.0
        %331 = vmatpush1.msra.mxu0 0.0
        %332 = vmatprep.subr.mxu0 0.0
        %333 = vmatpush1.msra.mxu0 0.0
        %334 = vmatprep.subr.mxu0 0.0
        %335 = vmatpush1.msra.mxu0 0.0
        %336 = vmatprep.subr.mxu0 0.0
        %337 = vmatpush1.msra.mxu0 0.0
        %338 = vmatprep.subr.mxu0 0.0
        %339 = vmatpush1.msra.mxu0 0.0
        %340 = vmatprep.subr.mxu0 0.0
        %341 = vmatpush1.msra.mxu0 0.0
        %342 = vmatprep.subr.mxu0 0.0
        %343 = vmatpush1.msra.mxu0 0.0
        %344 = vmatprep.subr.mxu0 0.0
        %345 = vmatpush1.msra.mxu0 0.0
        %346 = vmatprep.mubr.f32.mxu0 0.0
        %347 = vmatmul.mubr.f32.gmra.mrb[0].mxu0 %v209
        %v348 = vpop.f32.mrb[0].mxu0
        %v349 = vadd.f32 0.0, %v348
        %v350 = vpop.f32.mrb[0].mxu0
        %v351 = vadd.f32 0.0, %v350
        %352 = vdwg.mxu0
        %353 = vmatprep.subr.mxu0 %v203
        %354 = vmatpush1.msra.mxu0 %v202
        %355 = vmatprep.subr.mxu0 0.0
        %356 = vmatpush1.msra.mxu0 0.0
        %357 = vmatprep.subr.mxu0 0.0
        %358 = vmatpush1.msra.mxu0 0.0
        %359 = vmatprep.subr.mxu0 0.0
        %360 = vmatpush1.msra.mxu0 0.0
        %361 = vmatprep.subr.mxu0 0.0
        %362 = vmatpush1.msra.mxu0 0.0
        %363 = vmatprep.subr.mxu0 0.0
        %364 = vmatpush1.msra.mxu0 0.0
        %365 = vmatprep.subr.mxu0 0.0
        %366 = vmatpush1.msra.mxu0 0.0
        %367 = vmatprep.subr.mxu0 0.0
        %368 = vmatpush1.msra.mxu0 0.0
        %369 = vmatprep.subr.mxu0 0.0
        %370 = vmatpush1.msra.mxu0 0.0
        %371 = vmatprep.subr.mxu0 0.0
        %372 = vmatpush1.msra.mxu0 0.0
        %373 = vmatprep.subr.mxu0 0.0
        %374 = vmatpush1.msra.mxu0 0.0
        %375 = vmatprep.subr.mxu0 0.0
        %376 = vmatpush1.msra.mxu0 0.0
        %377 = vmatprep.subr.mxu0 0.0
        %378 = vmatpush1.msra.mxu0 0.0
        %379 = vmatprep.subr.mxu0 0.0
        %380 = vmatpush1.msra.mxu0 0.0
        %381 = vmatprep.subr.mxu0 0.0
        %382 = vmatpush1.msra.mxu0 0.0
        %383 = vmatprep.subr.mxu0 0.0
        %384 = vmatpush1.msra.mxu0 0.0
        %385 = vmatprep.subr.mxu0 0.0
        %386 = vmatpush1.msra.mxu0 0.0
        %387 = vmatprep.subr.mxu0 0.0
        %388 = vmatpush1.msra.mxu0 0.0
        %389 = vmatprep.subr.mxu0 0.0
        %390 = vmatpush1.msra.mxu0 0.0
        %391 = vmatprep.subr.mxu0 0.0
        %392 = vmatpush1.msra.mxu0 0.0
        %393 = vmatprep.subr.mxu0 0.0
        %394 = vmatpush1.msra.mxu0 0.0
        %395 = vmatprep.subr.mxu0 0.0
        %396 = vmatpush1.msra.mxu0 0.0
        %397 = vmatprep.subr.mxu0 0.0
        %398 = vmatpush1.msra.mxu0 0.0
        %399 = vmatprep.subr.mxu0 0.0
        %400 = vmatpush1.msra.mxu0 0.0
        %401 = vmatprep.subr.mxu0 0.0
        %402 = vmatpush1.msra.mxu0 0.0
        %403 = vmatprep.subr.mxu0 0.0
        %404 = vmatpush1.msra.mxu0 0.0
        %405 = vmatprep.subr.mxu0 0.0
        %406 = vmatpush1.msra.mxu0 0.0
        %407 = vmatprep.subr.mxu0 0.0
        %408 = vmatpush1.msra.mxu0 0.0
        %409 = vmatprep.subr.mxu0 0.0
        %410 = vmatpush1.msra.mxu0 0.0
        %411 = vmatprep.subr.mxu0 0.0
        %412 = vmatpush1.msra.mxu0 0.0
        %413 = vmatprep.subr.mxu0 0.0
        %414 = vmatpush1.msra.mxu0 0.0
        %415 = vmatprep.subr.mxu0 0.0
        %416 = vmatpush1.msra.mxu0 0.0
        %417 = vmatprep.mubr.f32.mxu0 0.0
        %418 = vmatmul.mubr.f32.gmra.mrb[0].mxu0 %v209
        %v419 = vpop.f32.mrb[0].mxu0
        %v420 = vadd.f32 0.0, %v419
        %v421 = vpop.f32.mrb[0].mxu0
        %v422 = vadd.f32 0.0, %v421
        %423 = vdwg.mxu0
        %424 = vmatprep.subr.mxu0 %v205
        %425 = vmatpush1.msra.mxu0 %v204
        %426 = vmatprep.subr.mxu0 0.0
        %427 = vmatpush1.msra.mxu0 0.0
        %428 = vmatprep.subr.mxu0 0.0
        %429 = vmatpush1.msra.mxu0 0.0
        %430 = vmatprep.subr.mxu0 0.0
        %431 = vmatpush1.msra.mxu0 0.0
        %432 = vmatprep.subr.mxu0 0.0
        %433 = vmatpush1.msra.mxu0 0.0
        %434 = vmatprep.subr.mxu0 0.0
        %435 = vmatpush1.msra.mxu0 0.0
        %436 = vmatprep.subr.mxu0 0.0
        %437 = vmatpush1.msra.mxu0 0.0
        %438 = vmatprep.subr.mxu0 0.0
        %439 = vmatpush1.msra.mxu0 0.0
        %440 = vmatprep.subr.mxu0 0.0
        %441 = vmatpush1.msra.mxu0 0.0
        %442 = vmatprep.subr.mxu0 0.0
        %443 = vmatpush1.msra.mxu0 0.0
        %444 = vmatprep.subr.mxu0 0.0
        %445 = vmatpush1.msra.mxu0 0.0
        %446 = vmatprep.subr.mxu0 0.0
        %447 = vmatpush1.msra.mxu0 0.0
        %448 = vmatprep.subr.mxu0 0.0
        %449 = vmatpush1.msra.mxu0 0.0
        %450 = vmatprep.subr.mxu0 0.0
        %451 = vmatpush1.msra.mxu0 0.0
        %452 = vmatprep.subr.mxu0 0.0
        %453 = vmatpush1.msra.mxu0 0.0
        %454 = vmatprep.subr.mxu0 0.0
        %455 = vmatpush1.msra.mxu0 0.0
        %456 = vmatprep.subr.mxu0 0.0
        %457 = vmatpush1.msra.mxu0 0.0
        %458 = vmatprep.subr.mxu0 0.0
        %459 = vmatpush1.msra.mxu0 0.0
        %460 = vmatprep.subr.mxu0 0.0
        %461 = vmatpush1.msra.mxu0 0.0
        %462 = vmatprep.subr.mxu0 0.0
        %463 = vmatpush1.msra.mxu0 0.0
        %464 = vmatprep.subr.mxu0 0.0
        %465 = vmatpush1.msra.mxu0 0.0
        %466 = vmatprep.subr.mxu0 0.0
        %467 = vmatpush1.msra.mxu0 0.0
        %468 = vmatprep.subr.mxu0 0.0
        %469 = vmatpush1.msra.mxu0 0.0
        %470 = vmatprep.subr.mxu0 0.0
        %471 = vmatpush1.msra.mxu0 0.0
        %472 = vmatprep.subr.mxu0 0.0
        %473 = vmatpush1.msra.mxu0 0.0
        %474 = vmatprep.subr.mxu0 0.0
        %475 = vmatpush1.msra.mxu0 0.0
        %476 = vmatprep.subr.mxu0 0.0
        %477 = vmatpush1.msra.mxu0 0.0
        %478 = vmatprep.subr.mxu0 0.0
        %479 = vmatpush1.msra.mxu0 0.0
        %480 = vmatprep.subr.mxu0 0.0
        %481 = vmatpush1.msra.mxu0 0.0
        %482 = vmatprep.subr.mxu0 0.0
        %483 = vmatpush1.msra.mxu0 0.0
        %484 = vmatprep.subr.mxu0 0.0
        %485 = vmatpush1.msra.mxu0 0.0
        %486 = vmatprep.subr.mxu0 0.0
        %487 = vmatpush1.msra.mxu0 0.0
        %488 = vmatprep.mubr.f32.mxu0 0.0
        %489 = vmatmul.mubr.f32.gmra.mrb[0].mxu0 %v209
        %v490 = vpop.f32.mrb[0].mxu0
        %v491 = vadd.f32 0.0, %v490
        %v492 = vpop.f32.mrb[0].mxu0
        %v493 = vadd.f32 0.0, %v492
        %494 = vdwg.mxu0
        %495 = vst [vmem:[%s193] sm:$0xff] %v278
        %496 = vst [vmem:[%s193 + $0x8] sm:$0xff] %v280
        %497 = vst [vmem:[%s193 + $0x10] sm:$0xff] %v349
        %498 = vst [vmem:[%s193 + $0x18] sm:$0xff] %v351
        %499 = vst [vmem:[%s193 + $0x20] sm:$0xff] %v420
        %500 = vst [vmem:[%s193 + $0x28] sm:$0xff] %v422
        %501 = vst [vmem:[%s193 + $0x30] sm:$0xff] %v491
        %502 = vst [vmem:[%s193 + $0x38] sm:$0xff] %v493
        %s503 = sand.u32 %s91, 1
        %s504 = scalar_lea.sflag [#allocation4], %s503
        %s505 = sand.u32 %s91, 1
        %s506 = smul.addr %s505, 64
        %s507 = scalar_lea.vmem [#allocation7], %s506
        // Predicated region
        $region37: #{tpu_custom_call.1} parent=27 // pred_check
          %p508 = pneg %p101
        $region38: #{tpu_custom_call.1} parent=27 // pred_check_branch
          %510 = sbr.rel (%p508) target = $region40
        $region39: #{tpu_custom_call.1} parent=27 // pred_region
          %s511 = smul.u32 4, %s24
          %s512 = smul.u32 2, %s25
          %s514 = ssub.s32 1024, 1024
          %515 = vsyncadd %s504, %s514
          %s516 = smul.addr %s511, 2
          %s517 = sadd.s32 %s512, %s516
          %s518 = smul.addr %s517, 128
          %s519 = scalar_lea.hbm %s2, %s518
          %s520 = sshll.u32 %s507, 4
          %s521 = int_to_ptr.vmem [resolvable:$true] %s520
          %526 = dma.vmem_to_hbm [thread:$0]  %s521, 1024, %s519, %s504, 256, 256, 16
        $region40: #{tpu_custom_call.1} parent=27 // pred_fallthru
          _
      $region28: #{tpu_custom_call.1} parent=5 // pred_fallthru
        _
      %p527 = scmp.le.s32.totalorder 2, %s15
      // Predicated region
      $region41: #{tpu_custom_call.1} parent=5 // pred_check
        %p528 = pneg %p527
      $region42: #{tpu_custom_call.1} parent=5 // pred_check_branch
        %530 = sbr.rel (%p528) target = $region44
      $region43: #{tpu_custom_call.1} parent=5 // pred_region
        %s531 = ssub.s32 %s15, 2
        // Predicated region
        $region45: #{tpu_custom_call.1} parent=43 // pred_check
          %p532 = pneg %p107
        $region46: #{tpu_custom_call.1} parent=43 // pred_check_branch
          %534 = sbr.rel (%p532) target = $region48
        $region47: #{tpu_custom_call.1} parent=43 // pred_region
          %s535 = sand.u32 %s92, 1
          %s536 = scalar_lea.sflag [#allocation4], %s535
          %s537 = sand.u32 %s92, 1
          %s538 = smul.addr %s537, 64
          %s539 = scalar_lea.vmem [#allocation7], %s538
          %540 = dma.done %s536, 1024
        $region48: #{tpu_custom_call.1} parent=43 // pred_fallthru
          _
      $region44: #{tpu_custom_call.1} parent=5 // pred_fallthru
        _
    $region6: #{tpu_custom_call.1} parent=1 // loop_footer
      %s19 = sadd.s32 1, %s15
    $region7: #{tpu_custom_call.1} parent=1 // loop_footer_branch
      %14 = sbr.rel target = $region3
    $region8: #{tpu_custom_call.1} parent=1 // loop_exit
      _
    %541 = vsyncpa [#allocation3], 1
    %s542 = scalar_lea.sflag [#allocation3], 1
    %543 = vsyncpa %s542, 1
    %544 = vsyncpa [#allocation6], 1
    %s545 = scalar_lea.sflag [#allocation6], 1
    %546 = vsyncpa %s545, 1
    %547 = vsyncpa [#allocation4], 1
    %s548 = scalar_lea.sflag [#allocation4], 1
    %549 = vsyncpa %s548, 1

</llo_original>
